<compile_context>
chip_gen: v5e
topology: v5e:2x2
jax: 0.10.0
libtpu: 0.0.40
codegen_flags: <defaults>
</compile_context>

<pallas_src>
import numpy as np
import jax
import jax.numpy as jnp
from jax.experimental import pallas as pl
from jax.experimental.pallas import tpu as pltpu

# ---- module hyper-parameters (from SSSLoss.__init__) ------------------------
AUDIO_SAMPLE_RATE = 16000
N_FFT = 128                      # small n_fft for the example
HOP = N_FFT // 4                 # MelSpectrogram hop_length = int(n_fft / 4)
N_MELS = 80
F_MIN = 0.0
F_MAX = 8000.0
EPS = 1e-7
ALPHA = 1.0

N_FREQ = N_FFT // 2 + 1          # onesided rfft bins (65)
FREQ_PAD = 128                   # freq axis padded to a lane-friendly 128
MEL_PAD = 128                    # mel axis padded to a lane-friendly 128
ROW_ALIGN = 16                   # bf16 sublane packing -> row tiles multiple of 16
MAX_TILE_ROWS = 1024             # fits v5e 16 MiB scoped default with headroom


# ---- deterministic "parameters": windowed DFT + mel filterbank ---------------
def _hz_to_mel(f):
    return 2595.0 * np.log10(1.0 + f / 700.0)


def _mel_to_hz(m):
    return 700.0 * (10.0 ** (m / 2595.0) - 1.0)


def make_mel_fb():
    # torchaudio.functional.melscale_fbanks, mel_scale="htk", norm=None
    all_freqs = np.linspace(0.0, AUDIO_SAMPLE_RATE / 2.0, N_FREQ)
    m_pts = np.linspace(_hz_to_mel(F_MIN), _hz_to_mel(F_MAX), N_MELS + 2)
    f_pts = _mel_to_hz(m_pts)
    f_diff = f_pts[1:] - f_pts[:-1]
    slopes = f_pts[None, :] - all_freqs[:, None]        # (n_freq, n_mels+2)
    down = -slopes[:, :-2] / f_diff[:-1]
    up = slopes[:, 2:] / f_diff[1:]
    fb = np.maximum(0.0, np.minimum(down, up))
    return fb.astype(np.float32)                        # (N_FREQ, N_MELS)


def make_windowed_dft():
    # Real one-sided DFT with the hann window folded in, cos and -sin packed
    # side-by-side into one 256-wide RHS:
    #   cols [0, N_FREQ)                 = w[n] * cos(2*pi*n*k/N)
    #   cols [FREQ_PAD, FREQ_PAD+N_FREQ) = -w[n] * sin(2*pi*n*k/N)
    n = np.arange(N_FFT)
    k = np.arange(N_FREQ)
    ang = 2.0 * np.pi * np.outer(n, k) / N_FFT
    window = 0.5 - 0.5 * np.cos(2.0 * np.pi * n / N_FFT)   # hann, periodic
    dft = np.zeros((N_FFT, 2 * FREQ_PAD), dtype=np.float32)
    dft[:, :N_FREQ] = window[:, None] * np.cos(ang)
    dft[:, FREQ_PAD:FREQ_PAD + N_FREQ] = -window[:, None] * np.sin(ang)
    return dft                                           # (N_FFT, 2*FREQ_PAD)


# ---- Pallas kernel -----------------------------------------------------------
def sss_kernel(fp_ref, ft_ref, dft_ref, mel_ref, out_ref):
    # fp_ref/ft_ref: (T, N_FFT) bf16 frame tiles; dft_ref: (128, 256) bf16;
    # mel_ref: (128, 128) bf16.  All loss math is f32 (MXU accumulates in f32).
    t = fp_ref.shape[0]
    dft = dft_ref[...]
    mel = mel_ref[...]

    def melspec(frames_bf16):
        ri = jnp.dot(frames_bf16, dft,
                     preferred_element_type=jnp.float32)        # (T, 256) f32
        re = ri[:, :FREQ_PAD]
        im = ri[:, FREQ_PAD:]
        power = re * re + im * im                               # |STFT|^2, f32
        # TODO(synk): keep the mel matmul LHS in f32 if a parity check of the
        # log2 term vs the torch f32 reference shows drift near EPS.
        return jnp.dot(power.astype(jnp.bfloat16), mel,
                       preferred_element_type=jnp.float32)      # (T, 128) f32

    s_pred = melspec(fp_ref[...])
    s_true = melspec(ft_ref[...])

    lin = jnp.abs(s_pred - s_true)
    logd = jnp.abs(jnp.log2(s_true + EPS) - jnp.log2(s_pred + EPS))
    combined = lin + ALPHA * logd                                # (T, 128)

    # Reduce only over the row groups -> keep one (8,128) vreg per tile; the
    # final cross-lane/sublane reduce + mean happens once in the wrapper.
    partial = jnp.sum(combined.reshape(t // 8, 8, 128), axis=0)  # (8, 128)
    out_ref[...] = partial.reshape(1, 8, 128)


# ---- wrapper -----------------------------------------------------------------
def sss_loss(x_pred, x_true):
    B, L = x_pred.shape
    pad = N_FFT // 2
    num_frames = 1 + L // HOP          # center=True reflect padding, pad=0

    def frame(x):
        # center=True reflect pad (same as torch.stft default).
        xp = jnp.pad(x, ((0, 0), (pad, pad)), mode="reflect")
        lp = xp.shape[1]
        lp_hop = int(np.ceil(lp / HOP) * HOP)
        xp = jnp.pad(xp, ((0, 0), (0, lp_hop - lp)))
        # hop = n_fft/4 -> frames are 4 consecutive HOP-sized blocks; build them
        # from shifted reshape views instead of an advanced-indexing gather.
        blocks = xp.reshape(B, lp_hop // HOP, HOP)
        shifts = [blocks[:, o:o + num_frames] for o in range(N_FFT // HOP)]
        fr = jnp.concatenate(shifts, axis=-1)            # (B, T_frames, N_FFT)
        return fr.reshape(B * num_frames, N_FFT)
    # TODO(synk): move framing in-kernel (DMA a contiguous audio slab per row
    # tile, build the 4 hop-shifted views in VMEM) to cut the ~4x-redundant
    # frame HBM traffic now that bf16 makes the kernel lean memory-bound.

    fp = frame(x_pred)
    ft = frame(x_true)

    rows = B * num_frames
    rows_a = int(np.ceil(rows / ROW_ALIGN) * ROW_ALIGN)
    if rows_a <= ROW_ALIGN:
        tile = ROW_ALIGN
    elif rows_a <= 2 * MAX_TILE_ROWS:
        # Split into >= 2 grid steps so the "parallel" grid can shard across
        # both v7x TensorCores (no effect on 1-TC v5e/v6e).
        half = (rows_a + 1) // 2
        tile = int(np.ceil(half / ROW_ALIGN) * ROW_ALIGN)
    else:
        tile = MAX_TILE_ROWS
    num_tiles = int(np.ceil(rows_a / tile))
    rows_pad = num_tiles * tile

    # bf16 frames: half the HBM/DMA traffic + native bf16 MXU. Padded rows are
    # exactly zero -> contribute exactly 0 to both L1 sums.
    fp = jnp.pad(fp, ((0, rows_pad - rows), (0, 0))).astype(jnp.bfloat16)
    ft = jnp.pad(ft, ((0, rows_pad - rows), (0, 0))).astype(jnp.bfloat16)

    dft = jnp.asarray(make_windowed_dft()).astype(jnp.bfloat16)   # (128, 256)
    mel = jnp.pad(jnp.asarray(make_mel_fb()),
                  ((0, FREQ_PAD - N_FREQ), (0, MEL_PAD - N_MELS))
                  ).astype(jnp.bfloat16)                          # (128, 128)
    # TODO(synk): run a parity check of the summed-|diff| loss (bf16 MXU
    # operands, f32 accumulation) against the torch f32 reference.

    flops = (2 * 2 * rows_pad * N_FFT * (2 * FREQ_PAD)
             + 2 * 2 * rows_pad * FREQ_PAD * MEL_PAD)
    transcendentals = 2 * rows_pad * MEL_PAD
    bytes_accessed = (2 * (2 * rows_pad * N_FFT)                          # bf16 frames
                      + 2 * (N_FFT * 2 * FREQ_PAD + FREQ_PAD * MEL_PAD)   # bf16 weights
                      + 4 * num_tiles * 8 * 128)                          # f32 partials

    partials = pl.pallas_call(
        sss_kernel,
        out_shape=jax.ShapeDtypeStruct((num_tiles, 8, 128), jnp.float32),
        grid=(num_tiles,),
        in_specs=[
            pl.BlockSpec((tile, N_FFT), lambda i: (i, 0)),          # pred frames
            pl.BlockSpec((tile, N_FFT), lambda i: (i, 0)),          # true frames
            pl.BlockSpec((N_FFT, 2 * FREQ_PAD), lambda i: (0, 0)),  # resident DFT
            pl.BlockSpec((FREQ_PAD, MEL_PAD), lambda i: (0, 0)),    # resident mel
        ],
        out_specs=pl.BlockSpec((1, 8, 128), lambda i: (i, 0, 0)),
        compiler_params=pltpu.CompilerParams(
            dimension_semantics=("parallel",),
            vmem_limit_bytes=32 << 20),     # raise v5e's 16 MiB scoped default
        cost_estimate=pl.CostEstimate(
            flops=flops,
            transcendentals=transcendentals,
            bytes_accessed=bytes_accessed),
    )(fp, ft, dft, mel)

    # All zero padding (rows / freq bins / mel bins) contributes exactly 0 to
    # both L1 sums; divide by the true element count (F.l1_loss 'mean').
    count = jnp.float32(B * N_MELS * num_frames)
    return jnp.sum(partials) / count


if __name__ == "__main__":
    key = jax.random.PRNGKey(0)
    k1, k2 = jax.random.split(key)
    B, L = 2, 512
    x_pred = jax.random.normal(k1, (B, L), dtype=jnp.float32)
    x_true = jax.random.normal(k2, (B, L), dtype=jnp.float32)

    loss = jax.jit(sss_loss)(x_pred, x_true)
    jax.block_until_ready(loss)
    print("KERNEL_OK")
</pallas_src>

<mosaic_0001>
module attributes {stable_mosaic.version = 11 : i64} {
  func.func @sss_kernel(%arg0: i32, %arg1: memref<32x128xbf16, #tpu.memory_space<vmem>>, %arg2: memref<32x128xbf16, #tpu.memory_space<vmem>>, %arg3: memref<128x256xbf16, #tpu.memory_space<vmem>>, %arg4: memref<128x128xbf16, #tpu.memory_space<vmem>>, %arg5: memref<1x8x128xf32, #tpu.memory_space<vmem>>) attributes {dimension_semantics = [#tpu.dimension_semantics<parallel>], iteration_bounds = array<i64: 2>, scalar_prefetch = 0 : i64, scratch_operands = 0 : i64, tpu.core_type = #tpu.core_type<tc>, window_params = [{transform_indices = @transform_0, window_bounds = array<i64: 32, 128>}, {transform_indices = @transform_1, window_bounds = array<i64: 32, 128>}, {pipeline_mode = #tpu.pipeline_mode<synchronous>, transform_indices = @transform_2, window_bounds = array<i64: 128, 256>}, {pipeline_mode = #tpu.pipeline_mode<synchronous>, transform_indices = @transform_3, window_bounds = array<i64: 128, 128>}, {transform_indices = @transform_4, window_bounds = array<i64: 1, 8, 128>}]} {
    %c0 = arith.constant 0 : index
    %c0_0 = arith.constant 0 : index
    %0 = vector.load %arg3[%c0, %c0_0] : memref<128x256xbf16, #tpu.memory_space<vmem>>, vector<128x256xbf16>
    %c0_1 = arith.constant 0 : index
    %c0_2 = arith.constant 0 : index
    %1 = vector.load %arg4[%c0_1, %c0_2] : memref<128x128xbf16, #tpu.memory_space<vmem>>, vector<128x128xbf16>
    %c0_3 = arith.constant 0 : index
    %c0_4 = arith.constant 0 : index
    %2 = vector.load %arg1[%c0_3, %c0_4] : memref<32x128xbf16, #tpu.memory_space<vmem>>, vector<32x128xbf16>
    %cst = arith.constant dense<0.000000e+00> : vector<32x256xf32>
    %3 = tpu.matmul %2, %0, %cst {dimension_numbers = #tpu.dot_dimension_numbers<[1], [0], [0], [1], [0, 0, 1, 1], [], []>} : vector<32x128xbf16>, vector<128x256xbf16>, vector<32x256xf32> -> vector<32x256xf32>
    %4 = vector.extract_strided_slice %3 {offsets = [0, 0], sizes = [32, 128], strides = [1, 1]} : vector<32x256xf32> to vector<32x128xf32>
    %5 = vector.extract_strided_slice %3 {offsets = [0, 128], sizes = [32, 128], strides = [1, 1]} : vector<32x256xf32> to vector<32x128xf32>
    %6 = arith.mulf %4, %4 : vector<32x128xf32>
    %7 = arith.mulf %5, %5 : vector<32x128xf32>
    %8 = arith.addf %6, %7 : vector<32x128xf32>
    %9 = arith.truncf %8 : vector<32x128xf32> to vector<32x128xbf16>
    %cst_5 = arith.constant dense<0.000000e+00> : vector<32x128xf32>
    %10 = tpu.matmul %9, %1, %cst_5 {dimension_numbers = #tpu.dot_dimension_numbers<[1], [0], [0], [1], [0, 0, 1, 1], [], []>} : vector<32x128xbf16>, vector<128x128xbf16>, vector<32x128xf32> -> vector<32x128xf32>
    %c0_6 = arith.constant 0 : index
    %c0_7 = arith.constant 0 : index
    %11 = vector.load %arg2[%c0_6, %c0_7] : memref<32x128xbf16, #tpu.memory_space<vmem>>, vector<32x128xbf16>
    %cst_8 = arith.constant dense<0.000000e+00> : vector<32x256xf32>
    %12 = tpu.matmul %11, %0, %cst_8 {dimension_numbers = #tpu.dot_dimension_numbers<[1], [0], [0], [1], [0, 0, 1, 1], [], []>} : vector<32x128xbf16>, vector<128x256xbf16>, vector<32x256xf32> -> vector<32x256xf32>
    %13 = vector.extract_strided_slice %12 {offsets = [0, 0], sizes = [32, 128], strides = [1, 1]} : vector<32x256xf32> to vector<32x128xf32>
    %14 = vector.extract_strided_slice %12 {offsets = [0, 128], sizes = [32, 128], strides = [1, 1]} : vector<32x256xf32> to vector<32x128xf32>
    %15 = arith.mulf %13, %13 : vector<32x128xf32>
    %16 = arith.mulf %14, %14 : vector<32x128xf32>
    %17 = arith.addf %15, %16 : vector<32x128xf32>
    %18 = arith.truncf %17 : vector<32x128xf32> to vector<32x128xbf16>
    %cst_9 = arith.constant dense<0.000000e+00> : vector<32x128xf32>
    %19 = tpu.matmul %18, %1, %cst_9 {dimension_numbers = #tpu.dot_dimension_numbers<[1], [0], [0], [1], [0, 0, 1, 1], [], []>} : vector<32x128xbf16>, vector<128x128xbf16>, vector<32x128xf32> -> vector<32x128xf32>
    %20 = arith.subf %10, %19 : vector<32x128xf32>
    %21 = math.absf %20 : vector<32x128xf32>
    %cst_10 = arith.constant 1.000000e-07 : f32
    %22 = vector.broadcast %cst_10 : f32 to vector<32x128xf32>
    %23 = arith.addf %19, %22 : vector<32x128xf32>
    %24 = math.log %23 : vector<32x128xf32>
    %cst_11 = arith.constant 2.000000e+00 : f32
    %25 = math.log %cst_11 : f32
    %26 = vector.broadcast %25 : f32 to vector<32x128xf32>
    %27 = arith.divf %24, %26 : vector<32x128xf32>
    %cst_12 = arith.constant 1.000000e-07 : f32
    %28 = vector.broadcast %cst_12 : f32 to vector<32x128xf32>
    %29 = arith.addf %10, %28 : vector<32x128xf32>
    %30 = math.log %29 : vector<32x128xf32>
    %cst_13 = arith.constant 2.000000e+00 : f32
    %31 = math.log %cst_13 : f32
    %32 = vector.broadcast %31 : f32 to vector<32x128xf32>
    %33 = arith.divf %30, %32 : vector<32x128xf32>
    %34 = arith.subf %27, %33 : vector<32x128xf32>
    %35 = math.absf %34 : vector<32x128xf32>
    %cst_14 = arith.constant 1.000000e+00 : f32
    %36 = vector.broadcast %cst_14 : f32 to vector<32x128xf32>
    %37 = arith.mulf %36, %35 : vector<32x128xf32>
    %38 = arith.addf %21, %37 : vector<32x128xf32>
    %39 = vector.shape_cast %38 : vector<32x128xf32> to vector<4x8x128xf32>
    %cst_15 = arith.constant dense<0.000000e+00> : vector<8x128xf32>
    %40 = vector.multi_reduction <add>, %39, %cst_15 [0] : vector<4x8x128xf32> to vector<8x128xf32>
    %41 = vector.shape_cast %40 : vector<8x128xf32> to vector<1x8x128xf32>
    %c0_16 = arith.constant 0 : index
    %c0_17 = arith.constant 0 : index
    %c0_18 = arith.constant 0 : index
    %42 = vector.load %arg5[%c0_16, %c0_17, %c0_18] : memref<1x8x128xf32, #tpu.memory_space<vmem>>, vector<1x8x128xf32>
    tpu.vector_store %arg5[%c0_16, %c0_17, %c0_18], %41 {strides = array<i32>} : memref<1x8x128xf32, #tpu.memory_space<vmem>>, vector<1x8x128xf32>,
    return
  }
  func.func @transform_0(%arg0: i32) -> (i32, i32) {
    %c0_i32 = arith.constant 0 : i32
    %c0_i32_0 = arith.constant 0 : i32
    return %arg0, %c0_i32 : i32, i32
  }
  func.func @transform_1(%arg0: i32) -> (i32, i32) {
    %c0_i32 = arith.constant 0 : i32
    %c0_i32_0 = arith.constant 0 : i32
    return %arg0, %c0_i32 : i32, i32
  }
  func.func @transform_2(%arg0: i32) -> (i32, i32) {
    %c0_i32 = arith.constant 0 : i32
    %c0_i32_0 = arith.constant 0 : i32
    %c0_i32_1 = arith.constant 0 : i32
    return %c0_i32, %c0_i32_0 : i32, i32
  }
  func.func @transform_3(%arg0: i32) -> (i32, i32) {
    %c0_i32 = arith.constant 0 : i32
    %c0_i32_0 = arith.constant 0 : i32
    %c0_i32_1 = arith.constant 0 : i32
    return %c0_i32, %c0_i32_0 : i32, i32
  }
  func.func @transform_4(%arg0: i32) -> (i32, i32, i32) {
    %c0_i32 = arith.constant 0 : i32
    %c0_i32_0 = arith.constant 0 : i32
    %c0_i32_1 = arith.constant 0 : i32
    return %arg0, %c0_i32, %c0_i32_0 : i32, i32, i32
  }
}

</mosaic_0001>

<llo_original>
// kernel: sss_loss.1
$region0: #{sss_loss.1}
  #allocation0 [shape = 'u32[]', space=smem, size = 0x4, offset = 0x4, fixed_abs, tag = 'smem constant byte address 0x4 - core index']
  #allocation1 [shape = 'u32[72,128]{1,0:T(1,128)}', space=vmem, size = 0x9000, scoped, tag = 'internal scratch']
  %s0 = inlined_call_operand.vmem [shape: bf16[64,128], index: 0, kind: input, shape index: {}]
  %s1 = inlined_call_operand.vmem [shape: bf16[64,128], index: 1, kind: input, shape index: {}]
  %s2 = inlined_call_operand.vmem [shape: bf16[128,256], index: 2, kind: input, shape index: {}]
  %s3 = inlined_call_operand.vmem [shape: bf16[128,128], index: 3, kind: input, shape index: {}]
  %s4 = inlined_call_operand.vmem [shape: f32[2,8,128], index: 4, kind: output, shape index: {}]
  %s5 = sld [smem:[#allocation0]]
  $region49: #{sss_loss.1} parent=0
    _
  %s7 = ssub.s32 1, %s5
  %s8 = scalar_select 0, %s7, %s5
  loop: start=0, step=1, limit=4
  $region2: #{sss_loss.1} parent=0 // loop_pre_header
    _
  $region3: #{sss_loss.1} parent=0 // loop_header
    %s10 = sphi 0, %s14
    %p11 = scmp.ge.s32.totalorder %s10, 4
    %s20 = sphi 0, %s22
    %s23 = sphi 0, %s20
    %s24 = sphi 0, %s23
    %s40 = sphi 0, %s24
    %s46 = sphi 0, %s48
    %s49 = sphi 0, %s46
    %s50 = sphi 0, %s49
    %s66 = sphi 0, %s50
    %s70 = sphi 0, %s70
    %s72 = sphi 0, %s70
    %s73 = sphi 0, %s72
    %s87 = sphi 0, %s73
    %s91 = sphi 0, %s91
    %s93 = sphi 0, %s91
    %s94 = sphi 0, %s93
    %s108 = sphi 0, %s94
    %s114 = sphi 0, %s116
    %s117 = sphi 0, %s114
    %s118 = sphi 0, %s117
    %s134 = sphi 0, %s118
  $region4: #{sss_loss.1} parent=0 // loop_header_branch
    %13 = sbr.rel (%p11) target = $region8
  $region5: #{sss_loss.1} parent=0 // loop_body
    %s15 = ssub.s32 %s10, 1
    %s16 = ssub.s32 %s10, 2
    %s17 = sadd.s32 %s10, 1
    %s18 = ssub.s32 %s10, %s17
    %p19 = scmp.eq.s32.totalorder %s18, 0
    %s21 = sadd.s32 %s20, 1
    %s22 = scalar_select %p19, %s20, %s21
    %p25 = pneg %p19
    %p26 = scmp.eq.s32.totalorder %s10, 1
    %p27 = por %p25, %p26
    %p28 = scmp.ne.s32.totalorder %s20, %s23
    %p29 = scmp.eq.s32.totalorder %s10, 0
    %p30 = por %p28, %p29
    %p31 = scmp.ne.s32.totalorder %s20, %s23
    %p32 = scmp.eq.s32.totalorder %s15, 1
    %p33 = por %p31, %p32
    %p34 = scmp.ne.s32.totalorder %s23, %s24
    %p35 = scmp.eq.s32.totalorder %s15, 0
    %p36 = por %p34, %p35
    %p37 = scmp.ne.s32.totalorder %s23, %s24
    %p38 = scmp.eq.s32.totalorder %s16, 1
    %p39 = por %p37, %p38
    %p41 = scmp.ne.s32.totalorder %s24, %s40
    %p42 = scmp.eq.s32.totalorder %s16, 0
    %p43 = por %p41, %p42
    %s44 = ssub.s32 %s10, %s17
    %p45 = scmp.eq.s32.totalorder %s44, 0
    %s47 = sadd.s32 %s46, 1
    %s48 = scalar_select %p45, %s46, %s47
    %p51 = pneg %p45
    %p52 = scmp.eq.s32.totalorder %s10, 1
    %p53 = por %p51, %p52
    %p54 = scmp.ne.s32.totalorder %s46, %s49
    %p55 = scmp.eq.s32.totalorder %s10, 0
    %p56 = por %p54, %p55
    %p57 = scmp.ne.s32.totalorder %s46, %s49
    %p58 = scmp.eq.s32.totalorder %s15, 1
    %p59 = por %p57, %p58
    %p60 = scmp.ne.s32.totalorder %s49, %s50
    %p61 = scmp.eq.s32.totalorder %s15, 0
    %p62 = por %p60, %p61
    %p63 = scmp.ne.s32.totalorder %s49, %s50
    %p64 = scmp.eq.s32.totalorder %s16, 1
    %p65 = por %p63, %p64
    %p67 = scmp.ne.s32.totalorder %s50, %s66
    %p68 = scmp.eq.s32.totalorder %s16, 0
    %p69 = por %p67, %p68
    %s71 = sadd.s32 %s70, 1
    %p74 = scmp.eq.s32.totalorder %s10, 1
    %p75 = scmp.ne.s32.totalorder %s70, %s72
    %p76 = scmp.eq.s32.totalorder %s10, 0
    %p77 = por %p75, %p76
    %p78 = scmp.ne.s32.totalorder %s70, %s72
    %p79 = scmp.eq.s32.totalorder %s15, 1
    %p80 = por %p78, %p79
    %p81 = scmp.ne.s32.totalorder %s72, %s73
    %p82 = scmp.eq.s32.totalorder %s15, 0
    %p83 = por %p81, %p82
    %p84 = scmp.ne.s32.totalorder %s72, %s73
    %p85 = scmp.eq.s32.totalorder %s16, 1
    %p86 = por %p84, %p85
    %p88 = scmp.ne.s32.totalorder %s73, %s87
    %p89 = scmp.eq.s32.totalorder %s16, 0
    %p90 = por %p88, %p89
    %s92 = sadd.s32 %s91, 1
    %p95 = scmp.eq.s32.totalorder %s10, 1
    %p96 = scmp.ne.s32.totalorder %s91, %s93
    %p97 = scmp.eq.s32.totalorder %s10, 0
    %p98 = por %p96, %p97
    %p99 = scmp.ne.s32.totalorder %s91, %s93
    %p100 = scmp.eq.s32.totalorder %s15, 1
    %p101 = por %p99, %p100
    %p102 = scmp.ne.s32.totalorder %s93, %s94
    %p103 = scmp.eq.s32.totalorder %s15, 0
    %p104 = por %p102, %p103
    %p105 = scmp.ne.s32.totalorder %s93, %s94
    %p106 = scmp.eq.s32.totalorder %s16, 1
    %p107 = por %p105, %p106
    %p109 = scmp.ne.s32.totalorder %s94, %s108
    %p110 = scmp.eq.s32.totalorder %s16, 0
    %p111 = por %p109, %p110
    %s112 = ssub.s32 %s10, %s17
    %p113 = scmp.eq.s32.totalorder %s112, 0
    %s115 = sadd.s32 %s114, 1
    %s116 = scalar_select %p113, %s114, %s115
    %p119 = pneg %p113
    %p120 = scmp.eq.s32.totalorder %s10, 1
    %p121 = por %p119, %p120
    %p122 = scmp.ne.s32.totalorder %s114, %s117
    %p123 = scmp.eq.s32.totalorder %s10, 0
    %p124 = por %p122, %p123
    %p125 = scmp.ne.s32.totalorder %s114, %s117
    %p126 = scmp.eq.s32.totalorder %s15, 1
    %p127 = por %p125, %p126
    %p128 = scmp.ne.s32.totalorder %s117, %s118
    %p129 = scmp.eq.s32.totalorder %s15, 0
    %p130 = por %p128, %p129
    %p131 = scmp.ne.s32.totalorder %s117, %s118
    %p132 = scmp.eq.s32.totalorder %s16, 1
    %p133 = por %p131, %p132
    %p135 = scmp.ne.s32.totalorder %s118, %s134
    %p136 = scmp.eq.s32.totalorder %s16, 0
    %p137 = por %p135, %p136
    %p138 = scmp.le.s32.totalorder 1, %s10
    %p139 = scmp.lt.s32.totalorder %s10, 3
    %p140 = pnand %p138, %p139
    %p141 = pneg %p140
    // Predicated region
    $region9: #{sss_loss.1} parent=5 // pred_check
      _
    $region10: #{sss_loss.1} parent=5 // pred_check_branch
      %143 = sbr.rel (%p140) target = $region12
    $region11: #{sss_loss.1} parent=5 // pred_region
      %s144 = ssub.s32 %s10, 1
      // Predicated region
      $region13: #{sss_loss.1} parent=11 // pred_check
        %p145 = pneg %p83
      $region14: #{sss_loss.1} parent=11 // pred_check_branch
        %147 = sbr.rel (%p145) target = $region16
      $region15: #{sss_loss.1} parent=11 // pred_region
        _
      $region16: #{sss_loss.1} parent=11 // pred_fallthru
        _
      // Predicated region
      $region17: #{sss_loss.1} parent=11 // pred_check
        %p148 = pneg %p104
      $region18: #{sss_loss.1} parent=11 // pred_check_branch
        %150 = sbr.rel (%p148) target = $region20
      $region19: #{sss_loss.1} parent=11 // pred_region
        _
      $region20: #{sss_loss.1} parent=11 // pred_fallthru
        _
    $region12: #{sss_loss.1} parent=5 // pred_fallthru
      _
    %p151 = scmp.lt.s32.totalorder %s10, 2
    // Predicated region
    $region21: #{sss_loss.1} parent=5 // pred_check
      %p152 = pneg %p151
    $region22: #{sss_loss.1} parent=5 // pred_check_branch
      %154 = sbr.rel (%p152) target = $region24
    $region23: #{sss_loss.1} parent=5 // pred_region
      // Predicated region
      $region25: #{sss_loss.1} parent=23 // pred_check
        %p155 = pneg %p30
      $region26: #{sss_loss.1} parent=23 // pred_check_branch
        %157 = sbr.rel (%p155) target = $region28
      $region27: #{sss_loss.1} parent=23 // pred_region
        %s158 = smul.u32 4, %s10
        %p159 = scmp.lt.s32.totalorder %s158, 7
        %s160 = scalar_select %p159, %s158, 7
        %s161 = smul.addr %s160, 4
        %s162 = scalar_lea.vmem %s0, %s161
        %s163 = smul.u32 4, %s10
      $region28: #{sss_loss.1} parent=23 // pred_fallthru
        _
      // Predicated region
      $region29: #{sss_loss.1} parent=23 // pred_check
        %p164 = pneg %p56
      $region30: #{sss_loss.1} parent=23 // pred_check_branch
        %166 = sbr.rel (%p164) target = $region32
      $region31: #{sss_loss.1} parent=23 // pred_region
        %s167 = smul.u32 4, %s10
        %p168 = scmp.lt.s32.totalorder %s167, 7
        %s169 = scalar_select %p168, %s167, 7
        %s170 = smul.addr %s169, 4
        %s171 = scalar_lea.vmem %s1, %s170
        %s172 = smul.u32 4, %s10
      $region32: #{sss_loss.1} parent=23 // pred_fallthru
        _
    $region24: #{sss_loss.1} parent=5 // pred_fallthru
      _
    %p173 = scmp.le.s32.totalorder 1, %s10
    %p174 = scmp.lt.s32.totalorder %s10, 3
    %p175 = pnand %p173, %p174
    %p176 = pneg %p175
    // Predicated region
    $region33: #{sss_loss.1} parent=5 // pred_check
      _
    $region34: #{sss_loss.1} parent=5 // pred_check_branch
      %178 = sbr.rel (%p175) target = $region36
    $region35: #{sss_loss.1} parent=5 // pred_region
      %s179 = ssub.s32 %s10, 1
      %s180 = smul.u32 4, %s15
      %p181 = scmp.lt.s32.totalorder %s180, 7
      %s182 = scalar_select %p181, %s180, 7
      %s183 = smul.addr %s182, 4
      %s184 = scalar_lea.vmem %s0, %s183
      %p185 = pneg %p36
      %p186 = pneg %p33
      %s187 = smul.u32 4, %s15
      %p188 = scmp.lt.s32.totalorder %s187, 7
      %s189 = scalar_select %p188, %s187, 7
      %s190 = smul.addr %s189, 4
      %s191 = scalar_lea.vmem %s1, %s190
      %p192 = pneg %p62
      %p193 = pneg %p59
      %p194 = pneg %p83
      %p195 = pneg %p80
      %p196 = pneg %p104
      %p197 = pneg %p101
      %p198 = pneg %p130
      %p199 = pneg %p127
      %p200 = scmp.lt.s32.totalorder %s15, 1
      %s201 = scalar_select %p200, %s15, 1
      %s202 = smul.addr %s201, 8
      %s203 = scalar_lea.vmem %s4, %s202
      %s204 = smul.u32 4, %s15
      %p205 = scmp.lt.s32.totalorder %s204, 7
      %s206 = scalar_select %p205, %s204, 7
      %s207 = smul.addr %s206, 4
      %s208 = scalar_lea.vmem %s0, %s207
      %s209 = smul.u32 4, %s15
      %s210 = smul.u32 4, %s15
      %p211 = scmp.lt.s32.totalorder %s210, 7
      %s212 = scalar_select %p211, %s210, 7
      %s213 = smul.addr %s212, 4
      %s214 = scalar_lea.vmem %s1, %s213
      %s215 = smul.u32 4, %s15
      %p216 = scmp.lt.s32.totalorder %s15, 1
      %s217 = scalar_select %p216, %s15, 1
      %s218 = smul.addr %s217, 8
      %s219 = scalar_lea.vmem %s4, %s218
      %v220 = vld [vmem:[%s2] sm:$0xff]
      %v221 = vld [vmem:[%s2 + $0x8] sm:$0xff]
      %v222 = vld [vmem:[%s2 + $0x10] sm:$0xff]
      %v223 = vld [vmem:[%s2 + $0x18] sm:$0xff]
      %v224 = vld [vmem:[%s2 + $0x20] sm:$0xff]
      %v225 = vld [vmem:[%s2 + $0x28] sm:$0xff]
      %v226 = vld [vmem:[%s2 + $0x30] sm:$0xff]
      %v227 = vld [vmem:[%s2 + $0x38] sm:$0xff]
      %v228 = vld [vmem:[%s2 + $0x40] sm:$0xff]
      %v229 = vld [vmem:[%s2 + $0x48] sm:$0xff]
      %v230 = vld [vmem:[%s2 + $0x50] sm:$0xff]
      %v231 = vld [vmem:[%s2 + $0x58] sm:$0xff]
      %v232 = vld [vmem:[%s2 + $0x60] sm:$0xff]
      %v233 = vld [vmem:[%s2 + $0x68] sm:$0xff]
      %v234 = vld [vmem:[%s2 + $0x70] sm:$0xff]
      %v235 = vld [vmem:[%s2 + $0x78] sm:$0xff]
      %v236 = vld [vmem:[%s3] sm:$0xf]
      %v237 = vld [vmem:[%s3 + $0x4] sm:$0xf]
      %v238 = vld [vmem:[%s3 + $0x8] sm:$0xf]
      %v239 = vld [vmem:[%s3 + $0xc] sm:$0xf]
      %v240 = vld [vmem:[%s3 + $0x10] sm:$0xf]
      %v241 = vld [vmem:[%s3 + $0x14] sm:$0xf]
      %v242 = vld [vmem:[%s3 + $0x18] sm:$0xf]
      %v243 = vld [vmem:[%s3 + $0x1c] sm:$0xf]
      %v244 = vld [vmem:[%s3 + $0x20] sm:$0xf]
      %v245 = vld [vmem:[%s3 + $0x24] sm:$0xf]
      %v246 = vld [vmem:[%s3 + $0x28] sm:$0xf]
      %v247 = vld [vmem:[%s3 + $0x2c] sm:$0xf]
      %v248 = vld [vmem:[%s3 + $0x30] sm:$0xf]
      %v249 = vld [vmem:[%s3 + $0x34] sm:$0xf]
      %v250 = vld [vmem:[%s3 + $0x38] sm:$0xf]
      %v251 = vld [vmem:[%s3 + $0x3c] sm:$0xf]
      %v252 = vld [vmem:[%s208] sm:$0xf]
      %v253 = vld [vmem:[%s208 + $0x4] sm:$0xf]
      %v254 = vld [vmem:[%s208 + $0x8] sm:$0xf]
      %v255 = vld [vmem:[%s208 + $0xc] sm:$0xf]
      %v260 = vunpack.c.l.b16 %v252
      %v261 = vunpack.c.l.b16 %v253
      %v262 = vunpack.c.l.b16 %v254
      %v263 = vunpack.c.l.b16 %v255
      %v264 = vpack.c.b16 %v261, %v260
      %v265 = vpack.c.b16 %v263, %v262
      %v284 = vunpack.c.l.b16 %v220
      %v285 = vunpack.c.h.b16 %v220
      %v286 = vunpack.c.l.b16 %v221
      %v287 = vunpack.c.h.b16 %v221
      %v288 = vunpack.c.l.b16 %v222
      %v289 = vunpack.c.h.b16 %v222
      %v290 = vunpack.c.l.b16 %v223
      %v291 = vunpack.c.h.b16 %v223
      %v292 = vunpack.c.l.b16 %v224
      %v293 = vunpack.c.h.b16 %v224
      %v294 = vunpack.c.l.b16 %v225
      %v295 = vunpack.c.h.b16 %v225
      %v296 = vunpack.c.l.b16 %v226
      %v297 = vunpack.c.h.b16 %v226
      %v298 = vunpack.c.l.b16 %v227
      %v299 = vunpack.c.h.b16 %v227
      %v300 = vunpack.c.l.b16 %v228
      %v301 = vunpack.c.h.b16 %v228
      %v302 = vunpack.c.l.b16 %v229
      %v303 = vunpack.c.h.b16 %v229
      %v304 = vunpack.c.l.b16 %v230
      %v305 = vunpack.c.h.b16 %v230
      %v306 = vunpack.c.l.b16 %v231
      %v307 = vunpack.c.h.b16 %v231
      %v308 = vunpack.c.l.b16 %v232
      %v309 = vunpack.c.h.b16 %v232
      %v310 = vunpack.c.l.b16 %v233
      %v311 = vunpack.c.h.b16 %v233
      %v312 = vunpack.c.l.b16 %v234
      %v313 = vunpack.c.h.b16 %v234
      %v314 = vunpack.c.l.b16 %v235
      %v315 = vunpack.c.h.b16 %v235
      %v316 = vpack.c.b16 %v286, %v284
      %v317 = vpack.c.b16 %v287, %v285
      %v318 = vpack.c.b16 %v290, %v288
      %v319 = vpack.c.b16 %v291, %v289
      %v320 = vpack.c.b16 %v294, %v292
      %v321 = vpack.c.b16 %v295, %v293
      %v322 = vpack.c.b16 %v298, %v296
      %v323 = vpack.c.b16 %v299, %v297
      %v324 = vpack.c.b16 %v302, %v300
      %v325 = vpack.c.b16 %v303, %v301
      %v326 = vpack.c.b16 %v306, %v304
      %v327 = vpack.c.b16 %v307, %v305
      %v328 = vpack.c.b16 %v310, %v308
      %v329 = vpack.c.b16 %v311, %v309
      %v330 = vpack.c.b16 %v314, %v312
      %v331 = vpack.c.b16 %v315, %v313
      %348 = vmatpush.bf16.msra.mxu0 %v330
      %349 = vmatpush.bf16.msra.mxu0 %v328
      %350 = vmatpush.bf16.msra.mxu0 %v326
      %351 = vmatpush.bf16.msra.mxu0 %v324
      %352 = vmatpush.bf16.msra.mxu0 %v322
      %353 = vmatpush.bf16.msra.mxu0 %v320
      %354 = vmatpush.bf16.msra.mxu0 %v318
      %355 = vmatpush.bf16.msra.mxu0 %v316
      %356 = vmatmul.bf16.gmra.mxu0 %v264
      %v357 = vpop.f32.mrf.mxu0
      %v358 = vadd.f32 0.0, %v357
      %v359 = vpop.f32.mrf.mxu0
      %v360 = vadd.f32 0.0, %v359
      %361 = vmatmul.bf16.gmra.mxu0 %v265
      %v362 = vpop.f32.mrf.mxu0
      %v363 = vadd.f32 0.0, %v362
      %v364 = vpop.f32.mrf.mxu0
      %v365 = vadd.f32 0.0, %v364
      %366 = vdwg.mxu0
      %367 = vmatpush.bf16.msra.mxu0 %v331
      %368 = vmatpush.bf16.msra.mxu0 %v329
      %369 = vmatpush.bf16.msra.mxu0 %v327
      %370 = vmatpush.bf16.msra.mxu0 %v325
      %371 = vmatpush.bf16.msra.mxu0 %v323
      %372 = vmatpush.bf16.msra.mxu0 %v321
      %373 = vmatpush.bf16.msra.mxu0 %v319
      %374 = vmatpush.bf16.msra.mxu0 %v317
      %375 = vmatmul.bf16.gmra.mxu0 %v264
      %v376 = vpop.f32.mrf.mxu0
      %v377 = vadd.f32 0.0, %v376
      %v378 = vpop.f32.mrf.mxu0
      %v379 = vadd.f32 0.0, %v378
      %380 = vmatmul.bf16.gmra.mxu0 %v265
      %v381 = vpop.f32.mrf.mxu0
      %v382 = vadd.f32 0.0, %v381
      %v383 = vpop.f32.mrf.mxu0
      %v384 = vadd.f32 0.0, %v383
      %385 = vdwg.mxu0
      %v386 = vmul.f32 %v358, %v358
      %v387 = vmul.f32 %v360, %v360
      %v388 = vmul.f32 %v363, %v363
      %v389 = vmul.f32 %v365, %v365
      %v390 = vmul.f32 %v377, %v377
      %v391 = vmul.f32 %v379, %v379
      %v392 = vmul.f32 %v382, %v382
      %v393 = vmul.f32 %v384, %v384
      %v394 = vadd.f32 %v386, %v390
      %v395 = vadd.f32 %v387, %v391
      %v396 = vadd.f32 %v388, %v392
      %v397 = vadd.f32 %v389, %v393
      %v398 = vpack.c.bf16 %v395, %v394
      %v399 = vpack.c.bf16 %v397, %v396
      %v416 = vunpack.c.l.b16 %v236
      %v417 = vunpack.c.l.b16 %v237
      %v418 = vunpack.c.l.b16 %v238
      %v419 = vunpack.c.l.b16 %v239
      %v420 = vunpack.c.l.b16 %v240
      %v421 = vunpack.c.l.b16 %v241
      %v422 = vunpack.c.l.b16 %v242
      %v423 = vunpack.c.l.b16 %v243
      %v424 = vunpack.c.l.b16 %v244
      %v425 = vunpack.c.l.b16 %v245
      %v426 = vunpack.c.l.b16 %v246
      %v427 = vunpack.c.l.b16 %v247
      %v428 = vunpack.c.l.b16 %v248
      %v429 = vunpack.c.l.b16 %v249
      %v430 = vunpack.c.l.b16 %v250
      %v431 = vunpack.c.l.b16 %v251
      %v432 = vpack.c.b16 %v417, %v416
      %v433 = vpack.c.b16 %v419, %v418
      %v434 = vpack.c.b16 %v421, %v420
      %v435 = vpack.c.b16 %v423, %v422
      %v436 = vpack.c.b16 %v425, %v424
      %v437 = vpack.c.b16 %v427, %v426
      %v438 = vpack.c.b16 %v429, %v428
      %v439 = vpack.c.b16 %v431, %v430
      %448 = vmatpush.bf16.msra.mxu0 %v439
      %449 = vmatpush.bf16.msra.mxu0 %v438
      %450 = vmatpush.bf16.msra.mxu0 %v437
      %451 = vmatpush.bf16.msra.mxu0 %v436
      %452 = vmatpush.bf16.msra.mxu0 %v435
      %453 = vmatpush.bf16.msra.mxu0 %v434
      %454 = vmatpush.bf16.msra.mxu0 %v433
      %455 = vmatpush.bf16.msra.mxu0 %v432
      %456 = vmatmul.bf16.gmra.mxu0 %v398
      %v457 = vpop.f32.mrf.mxu0
      %v458 = vadd.f32 0.0, %v457
      %v459 = vpop.f32.mrf.mxu0
      %v460 = vadd.f32 0.0, %v459
      %461 = vmatmul.bf16.gmra.mxu0 %v399
      %v462 = vpop.f32.mrf.mxu0
      %v463 = vadd.f32 0.0, %v462
      %v464 = vpop.f32.mrf.mxu0
      %v465 = vadd.f32 0.0, %v464
      %466 = vdwg.mxu0
      %v467 = vld [vmem:[%s214] sm:$0xf]
      %v468 = vld [vmem:[%s214 + $0x4] sm:$0xf]
      %v469 = vld [vmem:[%s214 + $0x8] sm:$0xf]
      %v470 = vld [vmem:[%s214 + $0xc] sm:$0xf]
      %v475 = vunpack.c.l.b16 %v467
      %v476 = vunpack.c.l.b16 %v468
      %v477 = vunpack.c.l.b16 %v469
      %v478 = vunpack.c.l.b16 %v470
      %v479 = vpack.c.b16 %v476, %v475
      %v480 = vpack.c.b16 %v478, %v477
      %483 = vmatpush.bf16.msra.mxu0 %v330
      %484 = vmatpush.bf16.msra.mxu0 %v328
      %485 = vmatpush.bf16.msra.mxu0 %v326
      %486 = vmatpush.bf16.msra.mxu0 %v324
      %487 = vmatpush.bf16.msra.mxu0 %v322
      %488 = vmatpush.bf16.msra.mxu0 %v320
      %489 = vmatpush.bf16.msra.mxu0 %v318
      %490 = vmatpush.bf16.msra.mxu0 %v316
      %491 = vmatmul.bf16.gmra.mxu0 %v479
      %v492 = vpop.f32.mrf.mxu0
      %v493 = vadd.f32 0.0, %v492
      %v494 = vpop.f32.mrf.mxu0
      %v495 = vadd.f32 0.0, %v494
      %496 = vmatmul.bf16.gmra.mxu0 %v480
      %v497 = vpop.f32.mrf.mxu0
      %v498 = vadd.f32 0.0, %v497
      %v499 = vpop.f32.mrf.mxu0
      %v500 = vadd.f32 0.0, %v499
      %501 = vdwg.mxu0
      %502 = vmatpush.bf16.msra.mxu0 %v331
      %503 = vmatpush.bf16.msra.mxu0 %v329
      %504 = vmatpush.bf16.msra.mxu0 %v327
      %505 = vmatpush.bf16.msra.mxu0 %v325
      %506 = vmatpush.bf16.msra.mxu0 %v323
      %507 = vmatpush.bf16.msra.mxu0 %v321
      %508 = vmatpush.bf16.msra.mxu0 %v319
      %509 = vmatpush.bf16.msra.mxu0 %v317
      %510 = vmatmul.bf16.gmra.mxu0 %v479
      %v511 = vpop.f32.mrf.mxu0
      %v512 = vadd.f32 0.0, %v511
      %v513 = vpop.f32.mrf.mxu0
      %v514 = vadd.f32 0.0, %v513
      %515 = vmatmul.bf16.gmra.mxu0 %v480
      %v516 = vpop.f32.mrf.mxu0
      %v517 = vadd.f32 0.0, %v516
      %v518 = vpop.f32.mrf.mxu0
      %v519 = vadd.f32 0.0, %v518
      %520 = vdwg.mxu0
      %v521 = vmul.f32 %v493, %v493
      %v522 = vmul.f32 %v495, %v495
      %v523 = vmul.f32 %v498, %v498
      %v524 = vmul.f32 %v500, %v500
      %v525 = vmul.f32 %v512, %v512
      %v526 = vmul.f32 %v514, %v514
      %v527 = vmul.f32 %v517, %v517
      %v528 = vmul.f32 %v519, %v519
      %v529 = vadd.f32 %v521, %v525
      %v530 = vadd.f32 %v522, %v526
      %v531 = vadd.f32 %v523, %v527
      %v532 = vadd.f32 %v524, %v528
      %v533 = vpack.c.bf16 %v530, %v529
      %v534 = vpack.c.bf16 %v532, %v531
      %535 = vmatpush.bf16.msra.mxu0 %v439
      %536 = vmatpush.bf16.msra.mxu0 %v438
      %537 = vmatpush.bf16.msra.mxu0 %v437
      %538 = vmatpush.bf16.msra.mxu0 %v436
      %539 = vmatpush.bf16.msra.mxu0 %v435
      %540 = vmatpush.bf16.msra.mxu0 %v434
      %541 = vmatpush.bf16.msra.mxu0 %v433
      %542 = vmatpush.bf16.msra.mxu0 %v432
      %543 = vmatmul.bf16.gmra.mxu0 %v533
      %v544 = vpop.f32.mrf.mxu0
      %v545 = vadd.f32 0.0, %v544
      %v546 = vpop.f32.mrf.mxu0
      %v547 = vadd.f32 0.0, %v546
      %548 = vmatmul.bf16.gmra.mxu0 %v534
      %v549 = vpop.f32.mrf.mxu0
      %v550 = vadd.f32 0.0, %v549
      %v551 = vpop.f32.mrf.mxu0
      %v552 = vadd.f32 0.0, %v551
      %553 = vdwg.mxu0
      %v554 = vsub.f32 %v458, %v545
      %v555 = vsub.f32 %v460, %v547
      %v556 = vsub.f32 %v463, %v550
      %v557 = vsub.f32 %v465, %v552
      %v558 = vand.u32 2147483647, %v554
      %v559 = vand.u32 2147483647, %v555
      %v560 = vand.u32 2147483647, %v556
      %v561 = vand.u32 2147483647, %v557
      %v562 = vadd.f32 %v545, 1e-07
      %v563 = vadd.f32 %v547, 1e-07
      %v564 = vadd.f32 %v550, 1e-07
      %v565 = vadd.f32 %v552, 1e-07
      %v566 = vlog2.pop %v562
      %v567 = vmul.f32 %v566, 0.6931472
      %v568 = vlog2.pop %v563
      %v569 = vmul.f32 %v568, 0.6931472
      %v570 = vlog2.pop %v564
      %v571 = vmul.f32 %v570, 0.6931472
      %v572 = vlog2.pop %v565
      %v573 = vmul.f32 %v572, 0.6931472
      %v574 = vrcp.pop 0.6931472
      %v575 = vmul.f32 0.6931472, %v574
      %v576 = vsub.f32 1.0, %v575
      %v577 = vmul.f32 %v574, %v576
      %v578 = vadd.f32 %v574, %v577
      %vm579 = vweird.f32 %v574
      %v580 = vsel %vm579, %v574, %v578
      %v581 = vmul.f32 %v567, %v580
      %v582 = vmul.f32 %v569, %v580
      %v583 = vmul.f32 %v571, %v580
      %v584 = vmul.f32 %v573, %v580
      %v585 = vadd.f32 %v458, 1e-07
      %v586 = vadd.f32 %v460, 1e-07
      %v587 = vadd.f32 %v463, 1e-07
      %v588 = vadd.f32 %v465, 1e-07
      %v589 = vlog2.pop %v585
      %v590 = vmul.f32 %v589, 0.6931472
      %v591 = vlog2.pop %v586
      %v592 = vmul.f32 %v591, 0.6931472
      %v593 = vlog2.pop %v587
      %v594 = vmul.f32 %v593, 0.6931472
      %v595 = vlog2.pop %v588
      %v596 = vmul.f32 %v595, 0.6931472
      %v597 = vmul.f32 %v590, %v580
      %v598 = vmul.f32 %v592, %v580
      %v599 = vmul.f32 %v594, %v580
      %v600 = vmul.f32 %v596, %v580
      %v601 = vsub.f32 %v581, %v597
      %v602 = vsub.f32 %v582, %v598
      %v603 = vsub.f32 %v583, %v599
      %v604 = vsub.f32 %v584, %v600
      %v605 = vand.u32 2147483647, %v601
      %v606 = vand.u32 2147483647, %v602
      %v607 = vand.u32 2147483647, %v603
      %v608 = vand.u32 2147483647, %v604
      %v609 = vadd.f32 %v558, %v605
      %v610 = vadd.f32 %v559, %v606
      %v611 = vadd.f32 %v560, %v607
      %v612 = vadd.f32 %v561, %v608
      %v613 = vadd.f32 %v609, %v610
      %v614 = vadd.f32 %v613, %v611
      %v615 = vadd.f32 %v614, %v612
      %616 = vst [vmem:[%s219] sm:$0xff] %v615
      %p617 = scmp.lt.s32.totalorder %s15, 1
      %s618 = scalar_select %p617, %s15, 1
      %s619 = smul.addr %s618, 8
      %s620 = scalar_lea.vmem %s4, %s619
      // Predicated region
      $region37: #{sss_loss.1} parent=35 // pred_check
        %p621 = pneg %p127
      $region38: #{sss_loss.1} parent=35 // pred_check_branch
        %623 = sbr.rel (%p621) target = $region40
      $region39: #{sss_loss.1} parent=35 // pred_region
        _
      $region40: #{sss_loss.1} parent=35 // pred_fallthru
        _
    $region36: #{sss_loss.1} parent=5 // pred_fallthru
      _
    %p624 = scmp.le.s32.totalorder 2, %s10
    // Predicated region
    $region41: #{sss_loss.1} parent=5 // pred_check
      %p625 = pneg %p624
    $region42: #{sss_loss.1} parent=5 // pred_check_branch
      %627 = sbr.rel (%p625) target = $region44
    $region43: #{sss_loss.1} parent=5 // pred_region
      %s628 = ssub.s32 %s10, 2
      // Predicated region
      $region45: #{sss_loss.1} parent=43 // pred_check
        %p629 = pneg %p133
      $region46: #{sss_loss.1} parent=43 // pred_check_branch
        %631 = sbr.rel (%p629) target = $region48
      $region47: #{sss_loss.1} parent=43 // pred_region
        %p632 = scmp.lt.s32.totalorder %s16, 1
        %s633 = scalar_select %p632, %s16, 1
        %s634 = smul.addr %s633, 8
        %s635 = scalar_lea.vmem %s4, %s634
      $region48: #{sss_loss.1} parent=43 // pred_fallthru
        _
    $region44: #{sss_loss.1} parent=5 // pred_fallthru
      _
  $region6: #{sss_loss.1} parent=0 // loop_footer
    %s14 = sadd.s32 1, %s10
  $region7: #{sss_loss.1} parent=0 // loop_footer_branch
    %9 = sbr.rel target = $region3
  $region8: #{sss_loss.1} parent=0 // loop_exit
    _

</llo_original>
